<compile_context>
chip_gen: v6e
topology: v6e:2x2x1
jax: 0.10.0
libtpu: 0.0.40
codegen_flags: <defaults>
</compile_context>

<pallas_src>
import functools

import numpy as np
import jax
import jax.numpy as jnp
from jax.experimental import pallas as pl
from jax.experimental.pallas import tpu as pltpu


def _round_up(x, m):
    return ((x + m - 1) // m) * m


def _cdiv(a, b):
    return -(-a // b)


def _vmem_budget_bytes():
    """~3/4 of physical VMEM: ~48 MiB on v7x (64 MiB), ~96 MiB on v5e/v6e (128 MiB)."""
    try:
        cap = int(pltpu.get_tpu_info().vmem_capacity_bytes)
    except Exception:
        cap = 64 * 1024 * 1024  # conservative fallback (v7x per-core VMEM)
    return (cap * 3) // 4


def _attraction_kernel(out_ref, tgt_ref, cemb_ref, clab_ref, csq_ref, acc_ref, *,
                       delta_a, hw, tile, nt_s):
    # out_ref : [C,  TILE] f32     (image embedding tile)
    # tgt_ref : [1,  TILE] i16     (label tile; upcast to i32 in-kernel)
    # cemb_ref: [K8, C]    f32     (center embeddings, rows >= K zero-padded)
    # clab_ref: [K8, 1]    i32     (center labels, rows >= K sentinel outside i16 range)
    # csq_ref : [K8, 1]    f32     (precomputed ||c||^2, hoisted out of the loop)
    # acc_ref : [2, K8, 128] f32   (row 0: attraction partial sums, row 1: counts)
    s = pl.program_id(1)
    h = pl.program_id(2)

    @pl.when(h == 0)
    def _init():
        acc_ref[...] = jnp.zeros_like(acc_ref)

    out = out_ref[...]                                        # [C, T] f32
    tgt = tgt_ref[...].astype(jnp.int32)                      # [1, T] i32
    cemb = cemb_ref[...]                                      # [K8, C]
    clab = clab_ref[...]                                      # [K8, 1]
    c_sq = csq_ref[...]                                       # [K8, 1]

    # Global flattened-spatial positions of this tile (UNclamped tile index, so
    # clamped-duplicate tiles past the real end are fully masked out).
    tile_idx = s * nt_s + h
    pos = tile_idx * tile + jax.lax.broadcasted_iota(jnp.int32, tgt.shape, 1)  # [1, T]
    in_range = pos < hw                                                         # [1, T]

    # ||c - x||^2 = ||c||^2 - 2 c.x + ||x||^2   (cross term on the MXU)
    scores = jnp.dot(cemb, out, preferred_element_type=jnp.float32)   # [K8, T]
    x_sq = jnp.sum(out * out, axis=0, keepdims=True)                  # [1,  T]
    sumsq = jnp.maximum(c_sq - 2.0 * scores + x_sq, 0.0)              # clamp (f32 cancellation)
    norms = jnp.sqrt(sumsq)                                           # [K8, T]  (EUP)
    hinged = jnp.maximum(norms - delta_a, 0.0)

    # Label match AND in-bounds; jnp.where (not multiply) so tail garbage can't leak.
    mask = jnp.logical_and(tgt == clab, in_range)                     # [K8, T]
    attr_part = jnp.sum(jnp.where(mask, hinged, 0.0), axis=-1, keepdims=True)   # [K8, 1]
    cnt_part = jnp.sum(mask.astype(jnp.float32), axis=-1, keepdims=True)        # [K8, 1]

    # Lane-dense accumulate (broadcast [K8,1] across all 128 lanes -> full,
    # unmasked vector stores); wrapper reads lane 0.
    acc_ref[0] = acc_ref[0] + attr_part
    acc_ref[1] = acc_ref[1] + cnt_part


def composed_hinged_loss_val(out_nchw, target, center_coords,
                             delta_a=0.1, delta_r=1.0,
                             alpha=1.0, beta=1.0, gamma=0.001,
                             max_tile=None):
    """out_nchw: [B, C, H, W] f32, target: [B, H, W] int labels,
    center_coords: list (len B) of lists of (y, x) tuples (same K per sample)."""
    out_nchw = jnp.asarray(out_nchw, jnp.float32)
    target = jnp.asarray(target, jnp.int32)
    B, C, H, W = out_nchw.shape
    HW = H * W
    K = len(center_coords[0])
    assert all(len(c) == K for c in center_coords), "fixed K per sample expected"
    # TODO(synk): ragged per-sample center counts would need per-sample masking.

    coords = np.asarray(center_coords, dtype=np.int32)        # [B, K, 2] (y, x)
    ys = jnp.asarray(coords[..., 0])
    xs = jnp.asarray(coords[..., 1])
    b_idx = jnp.arange(B)[:, None]

    cemb = out_nchw[b_idx, :, ys, xs].astype(jnp.float32)     # [B, K, C]
    clab = target[b_idx, ys, xs]                              # [B, K] i32

    # ---- pad K to a sublane multiple ---------------------------------------
    K8 = max(8, _round_up(K, 8))
    # Sentinel outside int16 range: can never equal an (int16-representable)
    # pixel label after the in-kernel upcast.
    PAD_CLAB = -(1 << 20)

    cemb_p = jnp.zeros((B, K8, C), jnp.float32).at[:, :K, :].set(cemb)
    clab_p = jnp.full((B, K8, 1), PAD_CLAB, jnp.int32).at[:, :K, 0].set(clab)
    csq_p = jnp.sum(cemb_p * cemb_p, axis=-1, keepdims=True)  # [B, K8, 1], hoisted ||c||^2

    # ---- TILE from VMEM budget (no HBM padding of the activation tensor) ----
    vmem_budget = _vmem_budget_bytes()
    # Per-spatial-column bytes: double-buffered out tile (f32) + tgt tile (i16),
    # plus ~8 live [K8, TILE] f32 intermediates (scores/norms/hinged/mask/...).
    per_col = 2 * (C * 4 + 2) + 8 * K8 * 4
    TILE = (vmem_budget // per_col) // 128 * 128
    TILE = max(128, min(TILE, 32768))
    TILE = min(TILE, _round_up(HW, 128))
    if max_tile is not None:
        TILE = min(TILE, max(128, (int(max_tile) // 128) * 128))

    n_tiles = _cdiv(HW, TILE)
    S = 2 if n_tiles >= 2 else 1          # spatial split -> both v7x TensorCores at B==1
    NT_S = _cdiv(n_tiles, S)

    out_flat = out_nchw.reshape(B, C, HW)
    # TODO(synk): int16 label stream assumes segmentation label ids fit in int16.
    tgt_flat = target.astype(jnp.int16).reshape(B, 1, HW)

    kernel = functools.partial(_attraction_kernel, delta_a=float(delta_a),
                               hw=HW, tile=TILE, nt_s=NT_S)

    def hw_idx(s, h):
        # Clamp so splits whose range runs past the last real tile re-read it;
        # the kernel masks those steps out entirely via the UNclamped position.
        return jnp.minimum(s * NT_S + h, n_tiles - 1)

    # Note: cemb/clab/csq block indices are constant in h, so Pallas does not
    # re-DMA them between consecutive steps of the inner (h) loop.
    acc = pl.pallas_call(
        kernel,
        out_shape=jax.ShapeDtypeStruct((B, S, 2, K8, 128), jnp.float32),
        grid_spec=pltpu.PrefetchScalarGridSpec(
            num_scalar_prefetch=0,
            grid=(B, S, NT_S),
            in_specs=[
                pl.BlockSpec((None, C, TILE), lambda b, s, h: (b, 0, hw_idx(s, h))),
                pl.BlockSpec((None, 1, TILE), lambda b, s, h: (b, 0, hw_idx(s, h))),
                pl.BlockSpec((None, K8, C), lambda b, s, h: (b, 0, 0)),
                pl.BlockSpec((None, K8, 1), lambda b, s, h: (b, 0, 0)),
                pl.BlockSpec((None, K8, 1), lambda b, s, h: (b, 0, 0)),
            ],
            out_specs=pl.BlockSpec((None, None, 2, K8, 128),
                                   lambda b, s, h: (b, s, 0, 0, 0)),
        ),
        compiler_params=pltpu.CompilerParams(
            dimension_semantics=("parallel", "parallel", "arbitrary"),
            vmem_limit_bytes=int(vmem_budget)),
    )(out_flat, tgt_flat, cemb_p, clab_p, csq_p)

    attr_sums = jnp.sum(acc[:, :, 0, :K, 0], axis=1)  # [B, K]  (sum over spatial splits)
    counts = jnp.sum(acc[:, :, 1, :K, 0], axis=1)     # [B, K]

    denom = jnp.where(counts > 1.0, counts - 1.0, counts)
    per_b_attr = jnp.sum(attr_sums / denom, axis=1)                    # [B]

    # ---- repelling / regularization: tiny, done in plain JAX on cemb -------
    dc = cemb[:, :, None, :] - cemb[:, None, :, :]                     # [B, K, K, C]
    cn = jnp.sqrt(jnp.sum(dc * dc, axis=-1))                           # [B, K, K]
    per_b_rep = jnp.sum(jnp.maximum(delta_r - cn, 0.0), axis=(1, 2)) - K * delta_r
    per_b_reg = jnp.sum(jnp.sqrt(jnp.sum(cemb * cemb, axis=-1)), axis=-1)

    # Reproduce the PyTorch module's cumulative re-normalization over the
    # batch loop exactly (the running loss is re-divided at every sample).
    attraction_loss = jnp.float32(0.0)
    repelling_loss = jnp.float32(0.0)
    regularization_loss = jnp.float32(0.0)
    for i in range(B):
        attraction_loss = (attraction_loss + per_b_attr[i]) / K
        if K > 1:
            repelling_loss = (repelling_loss + per_b_rep[i]) / (K * (K - 1))
        regularization_loss = (regularization_loss + per_b_reg[i]) / K

    loss = alpha * attraction_loss + beta * repelling_loss + gamma * regularization_loss
    return loss, attraction_loss, repelling_loss


def _reference(out_nchw, target, centers, delta_a, delta_r, alpha, beta, gamma):
    """NumPy mirror of the PyTorch forward (for a correctness check)."""
    out_np = np.asarray(out_nchw, np.float64)
    tgt_np = np.asarray(target)
    B = out_np.shape[0]

    attraction = 0.0
    for i in range(B):
        o = np.transpose(out_np[i], (1, 2, 0))
        t = tgt_np[i]
        cs = centers[i]
        for (cy, cx) in cs:
            lbl = t[cy, cx]
            ys_, xs_ = np.nonzero(t == lbl)
            dist = o[cy, cx] - o[ys_, xs_]
            norms = np.linalg.norm(dist, axis=1)
            hinged = np.maximum(norms - delta_a, 0.0)
            n = len(hinged)
            if n > 1:
                n -= 1
            attraction += hinged.sum() / n
        if len(cs) >= 1:
            attraction /= len(cs)

    repelling = 0.0
    for i in range(B):
        o = np.transpose(out_np[i], (1, 2, 0))
        cs = centers[i]
        arr = np.asarray(cs)
        if len(cs) > 1:
            for (cy, cx) in cs:
                dist = o[cy, cx] - o[arr[:, 0], arr[:, 1]]
                nrm = np.linalg.norm(dist, axis=1)
                repelling += np.maximum(delta_r - nrm, 0.0).sum() - delta_r
            repelling /= len(cs) * (len(cs) - 1)

    reg = 0.0
    for i in range(B):
        o = np.transpose(out_np[i], (1, 2, 0))
        cs = centers[i]
        for (cy, cx) in cs:
            reg += np.linalg.norm(o[cy, cx])
        if len(cs) > 0:
            reg /= len(cs)

    loss = alpha * attraction + beta * repelling + gamma * reg
    return np.array([loss, attraction, repelling])


if __name__ == "__main__":
    # --- config 1: small canonical shapes, single-tile fast path ------------
    B, C, H, W = 2, 4, 16, 16
    key = jax.random.PRNGKey(0)
    k1, k2 = jax.random.split(key)
    out = jax.random.normal(k1, (B, C, H, W), dtype=jnp.float32)
    target = jax.random.randint(k2, (B, H, W), 0, 3, dtype=jnp.int32)
    centers = [[(2, 3), (8, 8), (12, 5)],
               [(1, 1), (7, 10), (14, 14)]]

    loss, attr, rep = composed_hinged_loss_val(out, target, centers)
    jax.block_until_ready((loss, attr, rep))
    got = np.array([float(loss), float(attr), float(rep)])
    ref = _reference(np.asarray(out), np.asarray(target), centers,
                     0.1, 1.0, 1.0, 1.0, 0.001)
    np.testing.assert_allclose(got, ref, rtol=1e-4, atol=1e-4)

    # --- config 2: non-tile-divisible spatial size, forced small TILE to
    # exercise multi-tile accumulation, the dual spatial split and the
    # ragged-tail / clamped-tile masking paths ---------------------------------
    B2, C2, H2, W2 = 2, 4, 18, 15
    k3, k4 = jax.random.split(jax.random.PRNGKey(1))
    out2 = jax.random.normal(k3, (B2, C2, H2, W2), dtype=jnp.float32)
    target2 = jax.random.randint(k4, (B2, H2, W2), 0, 4, dtype=jnp.int32)
    centers2 = [[(2, 3), (8, 8), (12, 5), (17, 14)],
                [(1, 1), (7, 10), (14, 14), (0, 0)]]
    loss2, attr2, rep2 = composed_hinged_loss_val(out2, target2, centers2,
                                                  max_tile=128)
    jax.block_until_ready((loss2, attr2, rep2))
    got2 = np.array([float(loss2), float(attr2), float(rep2)])
    ref2 = _reference(np.asarray(out2), np.asarray(target2), centers2,
                      0.1, 1.0, 1.0, 1.0, 0.001)
    np.testing.assert_allclose(got2, ref2, rtol=1e-4, atol=1e-4)

    print("KERNEL_OK")
</pallas_src>

<mosaic_0001>
module attributes {stable_mosaic.version = 11 : i64} {
  func.func @_attraction_kernel(%arg0: i32, %arg1: i32, %arg2: i32, %arg3: memref<1x4x256xf32, #tpu.memory_space<vmem>>, %arg4: memref<1x1x256xi16, #tpu.memory_space<vmem>>, %arg5: memref<1x8x4xf32, #tpu.memory_space<vmem>>, %arg6: memref<1x8x1xi32, #tpu.memory_space<vmem>>, %arg7: memref<1x8x1xf32, #tpu.memory_space<vmem>>, %arg8: memref<1x1x2x8x128xf32, #tpu.memory_space<vmem>>) attributes {dimension_semantics = [#tpu.dimension_semantics<parallel>, #tpu.dimension_semantics<parallel>, #tpu.dimension_semantics<arbitrary>], iteration_bounds = array<i64: 2, 1, 1>, scalar_prefetch = 0 : i64, scratch_operands = 0 : i64, tpu.core_type = #tpu.core_type<tc>, window_params = [{transform_indices = @transform_0, window_bounds = array<i64: 1, 4, 256>}, {transform_indices = @transform_1, window_bounds = array<i64: 1, 1, 256>}, {transform_indices = @transform_2, window_bounds = array<i64: 1, 8, 4>}, {transform_indices = @transform_3, window_bounds = array<i64: 1, 8, 1>}, {transform_indices = @transform_4, window_bounds = array<i64: 1, 8, 1>}, {transform_indices = @transform_5, window_bounds = array<i64: 1, 1, 2, 8, 128>}]} {
    %c0_i32 = arith.constant 0 : i32
    %0 = arith.cmpi eq, %arg2, %c0_i32 : i32
    %1 = arith.extui %0 : i1 to i32
    %c0_i32_0 = arith.constant 0 : i32
    %2 = arith.cmpi ne, %1, %c0_i32_0 : i32
    scf.if %2 {
      %cst_43 = arith.constant 0.000000e+00 : f32
      %66 = vector.broadcast %cst_43 : f32 to vector<2x8x128xf32>
      %c0_44 = arith.constant 0 : index
      %c0_45 = arith.constant 0 : index
      %c0_46 = arith.constant 0 : index
      %c0_47 = arith.constant 0 : index
      %c0_48 = arith.constant 0 : index
      %67 = vector.load %arg8[%c0_44, %c0_45, %c0_46, %c0_47, %c0_48] : memref<1x1x2x8x128xf32, #tpu.memory_space<vmem>>, vector<1x1x2x8x128xf32>
      %68 = vector.shape_cast %67 : vector<1x1x2x8x128xf32> to vector<2x8x128xf32>
      %69 = vector.shape_cast %66 : vector<2x8x128xf32> to vector<1x1x2x8x128xf32>
      tpu.vector_store %arg8[%c0_44, %c0_45, %c0_46, %c0_47, %c0_48], %69 {strides = array<i32>} : memref<1x1x2x8x128xf32, #tpu.memory_space<vmem>>, vector<1x1x2x8x128xf32>,
    } else {
    }
    %c0 = arith.constant 0 : index
    %c0_1 = arith.constant 0 : index
    %c0_2 = arith.constant 0 : index
    %3 = vector.load %arg3[%c0, %c0_1, %c0_2] : memref<1x4x256xf32, #tpu.memory_space<vmem>>, vector<1x4x256xf32>
    %4 = vector.shape_cast %3 : vector<1x4x256xf32> to vector<4x256xf32>
    %c0_3 = arith.constant 0 : index
    %c0_4 = arith.constant 0 : index
    %c0_5 = arith.constant 0 : index
    %5 = vector.load %arg4[%c0_3, %c0_4, %c0_5] : memref<1x1x256xi16, #tpu.memory_space<vmem>>, vector<1x1x256xi16>
    %6 = vector.shape_cast %5 : vector<1x1x256xi16> to vector<1x256xi16>
    %7 = arith.extsi %6 : vector<1x256xi16> to vector<1x256xi32>
    %c0_6 = arith.constant 0 : index
    %c0_7 = arith.constant 0 : index
    %c0_8 = arith.constant 0 : index
    %8 = vector.load %arg5[%c0_6, %c0_7, %c0_8] : memref<1x8x4xf32, #tpu.memory_space<vmem>>, vector<1x8x4xf32>
    %9 = vector.shape_cast %8 : vector<1x8x4xf32> to vector<8x4xf32>
    %c0_9 = arith.constant 0 : index
    %c0_10 = arith.constant 0 : index
    %c0_11 = arith.constant 0 : index
    %10 = vector.load %arg6[%c0_9, %c0_10, %c0_11] : memref<1x8x1xi32, #tpu.memory_space<vmem>>, vector<1x8x1xi32>
    %11 = vector.shape_cast %10 : vector<1x8x1xi32> to vector<8x1xi32>
    %c0_12 = arith.constant 0 : index
    %c0_13 = arith.constant 0 : index
    %c0_14 = arith.constant 0 : index
    %12 = vector.load %arg7[%c0_12, %c0_13, %c0_14] : memref<1x8x1xf32, #tpu.memory_space<vmem>>, vector<1x8x1xf32>
    %13 = vector.shape_cast %12 : vector<1x8x1xf32> to vector<8x1xf32>
    %c1_i32 = arith.constant 1 : i32
    %14 = arith.muli %arg1, %c1_i32 : i32
    %15 = arith.addi %14, %arg2 : i32
    %c256_i32 = arith.constant 256 : i32
    %16 = arith.muli %15, %c256_i32 : i32
    %17 = tpu.iota {dimensions = array<i32: 1>} : vector<1x256xi32>
    %18 = vector.broadcast %16 : i32 to vector<1x256xi32>
    %19 = arith.addi %18, %17 : vector<1x256xi32>
    %c256_i32_15 = arith.constant 256 : i32
    %20 = vector.broadcast %c256_i32_15 : i32 to vector<1x256xi32>
    %21 = arith.cmpi slt, %19, %20 : vector<1x256xi32>
    %cst = arith.constant dense<0.000000e+00> : vector<8x256xf32>
    %22 = tpu.matmul %9, %4, %cst {dimension_numbers = #tpu.dot_dimension_numbers<[1], [0], [0], [1], [0, 0, 1, 1], [], []>} : vector<8x4xf32>, vector<4x256xf32>, vector<8x256xf32> -> vector<8x256xf32>
    %23 = arith.mulf %4, %4 : vector<4x256xf32>
    %cst_16 = arith.constant dense<0.000000e+00> : vector<256xf32>
    %24 = vector.multi_reduction <add>, %23, %cst_16 [0] : vector<4x256xf32> to vector<256xf32>
    %25 = vector.shape_cast %24 : vector<256xf32> to vector<1x256xf32>
    %cst_17 = arith.constant 2.000000e+00 : f32
    %26 = vector.broadcast %cst_17 : f32 to vector<8x256xf32>
    %27 = arith.mulf %26, %22 : vector<8x256xf32>
    %28 = vector.broadcast %13 : vector<8x1xf32> to vector<8x256xf32>
    %29 = arith.subf %28, %27 : vector<8x256xf32>
    %30 = vector.broadcast %25 : vector<1x256xf32> to vector<8x256xf32>
    %31 = arith.addf %29, %30 : vector<8x256xf32>
    %cst_18 = arith.constant 0.000000e+00 : f32
    %32 = vector.broadcast %cst_18 : f32 to vector<8x256xf32>
    %33 = arith.maximumf %31, %32 : vector<8x256xf32>
    %34 = math.sqrt %33 : vector<8x256xf32>
    %cst_19 = arith.constant 1.000000e-01 : f32
    %35 = vector.broadcast %cst_19 : f32 to vector<8x256xf32>
    %36 = arith.subf %34, %35 : vector<8x256xf32>
    %cst_20 = arith.constant 0.000000e+00 : f32
    %37 = vector.broadcast %cst_20 : f32 to vector<8x256xf32>
    %38 = arith.maximumf %36, %37 : vector<8x256xf32>
    %39 = vector.broadcast %7 : vector<1x256xi32> to vector<8x256xi32>
    %40 = vector.broadcast %11 : vector<8x1xi32> to vector<8x256xi32>
    %41 = arith.cmpi eq, %39, %40 : vector<8x256xi32>
    %42 = vector.broadcast %21 : vector<1x256xi1> to vector<8x256xi1>
    %43 = arith.andi %41, %42 : vector<8x256xi1>
    %cst_21 = arith.constant 0.000000e+00 : f32
    %44 = vector.broadcast %cst_21 : f32 to vector<8x256xf32>
    %45 = arith.select %43, %38, %44 : vector<8x256xi1>, vector<8x256xf32>
    %cst_22 = arith.constant dense<0.000000e+00> : vector<8xf32>
    %46 = vector.multi_reduction <add>, %45, %cst_22 [1] : vector<8x256xf32> to vector<8xf32>
    %47 = vector.shape_cast %46 : vector<8xf32> to vector<8x1xf32>
    %48 = arith.extui %43 : vector<8x256xi1> to vector<8x256xi32>
    %49 = arith.sitofp %48 : vector<8x256xi32> to vector<8x256xf32>
    %cst_23 = arith.constant dense<0.000000e+00> : vector<8xf32>
    %50 = vector.multi_reduction <add>, %49, %cst_23 [1] : vector<8x256xf32> to vector<8xf32>
    %51 = vector.shape_cast %50 : vector<8xf32> to vector<8x1xf32>
    %c0_24 = arith.constant 0 : index
    %c0_25 = arith.constant 0 : index
    %c0_26 = arith.constant 0 : index
    %c0_27 = arith.constant 0 : index
    %c0_28 = arith.constant 0 : index
    %52 = vector.load %arg8[%c0_24, %c0_25, %c0_26, %c0_27, %c0_28] : memref<1x1x2x8x128xf32, #tpu.memory_space<vmem>>, vector<1x1x1x8x128xf32>
    %53 = vector.shape_cast %52 : vector<1x1x1x8x128xf32> to vector<8x128xf32>
    %54 = vector.broadcast %47 : vector<8x1xf32> to vector<8x128xf32>
    %55 = arith.addf %53, %54 : vector<8x128xf32>
    %c0_29 = arith.constant 0 : index
    %c0_30 = arith.constant 0 : index
    %c0_31 = arith.constant 0 : index
    %c0_32 = arith.constant 0 : index
    %c0_33 = arith.constant 0 : index
    %56 = vector.load %arg8[%c0_29, %c0_30, %c0_31, %c0_32, %c0_33] : memref<1x1x2x8x128xf32, #tpu.memory_space<vmem>>, vector<1x1x1x8x128xf32>
    %57 = vector.shape_cast %56 : vector<1x1x1x8x128xf32> to vector<8x128xf32>
    %58 = vector.shape_cast %55 : vector<8x128xf32> to vector<1x1x1x8x128xf32>
    tpu.vector_store %arg8[%c0_29, %c0_30, %c0_31, %c0_32, %c0_33], %58 {strides = array<i32>} : memref<1x1x2x8x128xf32, #tpu.memory_space<vmem>>, vector<1x1x1x8x128xf32>,
    %c0_34 = arith.constant 0 : index
    %c0_35 = arith.constant 0 : index
    %c1 = arith.constant 1 : index
    %c0_36 = arith.constant 0 : index
    %c0_37 = arith.constant 0 : index
    %59 = vector.load %arg8[%c0_34, %c0_35, %c1, %c0_36, %c0_37] : memref<1x1x2x8x128xf32, #tpu.memory_space<vmem>>, vector<1x1x1x8x128xf32>
    %60 = vector.shape_cast %59 : vector<1x1x1x8x128xf32> to vector<8x128xf32>
    %61 = vector.broadcast %51 : vector<8x1xf32> to vector<8x128xf32>
    %62 = arith.addf %60, %61 : vector<8x128xf32>
    %c0_38 = arith.constant 0 : index
    %c0_39 = arith.constant 0 : index
    %c1_40 = arith.constant 1 : index
    %c0_41 = arith.constant 0 : index
    %c0_42 = arith.constant 0 : index
    %63 = vector.load %arg8[%c0_38, %c0_39, %c1_40, %c0_41, %c0_42] : memref<1x1x2x8x128xf32, #tpu.memory_space<vmem>>, vector<1x1x1x8x128xf32>
    %64 = vector.shape_cast %63 : vector<1x1x1x8x128xf32> to vector<8x128xf32>
    %65 = vector.shape_cast %62 : vector<8x128xf32> to vector<1x1x1x8x128xf32>
    tpu.vector_store %arg8[%c0_38, %c0_39, %c1_40, %c0_41, %c0_42], %65 {strides = array<i32>} : memref<1x1x2x8x128xf32, #tpu.memory_space<vmem>>, vector<1x1x1x8x128xf32>,
    return
  }
  func.func @transform_0(%arg0: i32, %arg1: i32, %arg2: i32) -> (i32, i32, i32) {
    %c1_i32 = arith.constant 1 : i32
    %0 = arith.muli %arg1, %c1_i32 : i32
    %1 = arith.addi %0, %arg2 : i32
    %c0_i32 = arith.constant 0 : i32
    %2 = arith.minsi %1, %c0_i32 : i32
    %c0_i32_0 = arith.constant 0 : i32
    %c0_i32_1 = arith.constant 0 : i32
    return %arg0, %c0_i32_0, %2 : i32, i32, i32
  }
  func.func @transform_1(%arg0: i32, %arg1: i32, %arg2: i32) -> (i32, i32, i32) {
    %c1_i32 = arith.constant 1 : i32
    %0 = arith.muli %arg1, %c1_i32 : i32
    %1 = arith.addi %0, %arg2 : i32
    %c0_i32 = arith.constant 0 : i32
    %2 = arith.minsi %1, %c0_i32 : i32
    %c0_i32_0 = arith.constant 0 : i32
    %c0_i32_1 = arith.constant 0 : i32
    return %arg0, %c0_i32_0, %2 : i32, i32, i32
  }
  func.func @transform_2(%arg0: i32, %arg1: i32, %arg2: i32) -> (i32, i32, i32) {
    %c0_i32 = arith.constant 0 : i32
    %c0_i32_0 = arith.constant 0 : i32
    %c0_i32_1 = arith.constant 0 : i32
    return %arg0, %c0_i32, %c0_i32_0 : i32, i32, i32
  }
  func.func @transform_3(%arg0: i32, %arg1: i32, %arg2: i32) -> (i32, i32, i32) {
    %c0_i32 = arith.constant 0 : i32
    %c0_i32_0 = arith.constant 0 : i32
    %c0_i32_1 = arith.constant 0 : i32
    return %arg0, %c0_i32, %c0_i32_0 : i32, i32, i32
  }
  func.func @transform_4(%arg0: i32, %arg1: i32, %arg2: i32) -> (i32, i32, i32) {
    %c0_i32 = arith.constant 0 : i32
    %c0_i32_0 = arith.constant 0 : i32
    %c0_i32_1 = arith.constant 0 : i32
    return %arg0, %c0_i32, %c0_i32_0 : i32, i32, i32
  }
  func.func @transform_5(%arg0: i32, %arg1: i32, %arg2: i32) -> (i32, i32, i32, i32, i32) {
    %c0_i32 = arith.constant 0 : i32
    %c0_i32_0 = arith.constant 0 : i32
    %c0_i32_1 = arith.constant 0 : i32
    %c0_i32_2 = arith.constant 0 : i32
    return %arg0, %arg1, %c0_i32, %c0_i32_0, %c0_i32_1 : i32, i32, i32, i32, i32
  }
}

</mosaic_0001>

<llo_original>
// kernel: tpu_custom_call.1
$region0: #{tpu_custom_call.1}
  #allocation0 [shape = 'u32[]', space=smem, size = 0x4, offset = 0x4, fixed_abs, tag = 'smem constant byte address 0x4 - core index']
  #allocation1 [shape = 'u32[144,128]{1,0:T(1,128)}', space=vmem, size = 0x12000, scoped, tag = 'internal scratch']
  %s0 = inlined_call_operand.vmem [shape: f32[2,4,256], index: 0, kind: input, shape index: {}]
  %s1 = inlined_call_operand.vmem [shape: s16[2,1,256], index: 1, kind: input, shape index: {}]
  %s2 = inlined_call_operand.vmem [shape: f32[2,8,4], index: 2, kind: input, shape index: {}]
  %s3 = inlined_call_operand.vmem [shape: s32[2,8,1], index: 3, kind: input, shape index: {}]
  %s4 = inlined_call_operand.vmem [shape: f32[2,8,1], index: 4, kind: input, shape index: {}]
  %s5 = inlined_call_operand.hbm [shape: f32[2,1,2,8,128], index: 5, kind: output, shape index: {}]
  %s6 = sld [smem:[#allocation0]]
  $region57: #{tpu_custom_call.1} parent=0
    _
  %s8 = ssub.s32 1, %s6
  %s9 = scalar_select 0, %s8, %s6
  $region1: #{tpu_custom_call.1} parent=0
    #allocation2 [shape = 'u8[16384]{0}', space=vmem, size = 0x4000, scoped, tag = 'output window, operand 0']
    #allocation3 [shape = 's32[2]{0}', space=sflag, size = 0x8, scoped, tag = 'scoped memory for tpu_custom_call.1']
    %10 = vsyncpa [#allocation3], 0
    %s11 = scalar_lea.sflag [#allocation3], 1
    %12 = vsyncpa %s11, 0
    loop: start=0, step=1, limit=4
    $region2: #{tpu_custom_call.1} parent=1 // loop_pre_header
      _
    $region3: #{tpu_custom_call.1} parent=1 // loop_header
      %s14 = sphi 0, %s18
      %p15 = scmp.ge.s32.totalorder %s14, 4
      %s21 = sphi 0, %s40
      %s22 = sphi 0, %s36
      %s23 = sphi 0, %s32
      %s24 = sphi 0, %s21
      %s25 = sphi 0, %s22
      %s26 = sphi 0, %s23
      %s27 = sphi 0, %s24
      %s28 = sphi 0, %s25
      %s29 = sphi 0, %s26
      %s51 = sphi 0, %s53
      %s54 = sphi 0, %s51
      %s55 = sphi 0, %s54
      %s71 = sphi 0, %s55
      %s85 = sphi 0, %s87
      %s88 = sphi 0, %s85
      %s89 = sphi 0, %s88
      %s105 = sphi 0, %s89
      %s111 = sphi 0, %s113
      %s114 = sphi 0, %s111
      %s115 = sphi 0, %s114
      %s131 = sphi 0, %s115
      %s137 = sphi 0, %s139
      %s140 = sphi 0, %s137
      %s141 = sphi 0, %s140
      %s157 = sphi 0, %s141
      %s163 = sphi 0, %s165
      %s166 = sphi 0, %s163
      %s167 = sphi 0, %s166
      %s183 = sphi 0, %s167
      %s191 = sphi 0, %s193
      %s194 = sphi 0, %s191
      %s195 = sphi 0, %s194
      %s211 = sphi 0, %s195
    $region4: #{tpu_custom_call.1} parent=1 // loop_header_branch
      %17 = sbr.rel (%p15) target = $region8
    $region5: #{tpu_custom_call.1} parent=1 // loop_body
      %s19 = ssub.s32 %s14, 1
      %s20 = ssub.s32 %s14, 2
      %s30 = sadd.s32 1, %s23
      %p31 = scmp.ge.s32.totalorder %s30, 1
      %s32 = scalar_select %p31, 0, %s30
      %s33 = sadd.s32 1, %s22
      %s34 = scalar_select %p31, %s33, %s22
      %p35 = scmp.ge.s32.totalorder %s34, 1
      %s36 = scalar_select %p35, 0, %s34
      %s37 = sadd.s32 1, %s21
      %s38 = scalar_select %p35, %s37, %s21
      %p39 = scmp.ge.s32.totalorder %s38, 2
      %s40 = scalar_select %p39, 0, %s38
      %s41 = sadd.s32 %s22, %s23
      %p42 = scmp.lt.s32.totalorder %s41, 0
      %s43 = scalar_select %p42, %s41, 0
      %s44 = sadd.s32 %s36, %s32
      %p45 = scmp.lt.s32.totalorder %s44, 0
      %s46 = scalar_select %p45, %s44, 0
      %s47 = ssub.s32 %s21, %s40
      %s48 = ssub.s32 %s43, %s46
      %s49 = sor.u32 %s47, %s48
      %p50 = scmp.eq.s32.totalorder %s49, 0
      %s52 = sadd.s32 %s51, 1
      %s53 = scalar_select %p50, %s51, %s52
      %p56 = pneg %p50
      %p57 = scmp.eq.s32.totalorder %s14, 1
      %p58 = por %p56, %p57
      %p59 = scmp.ne.s32.totalorder %s51, %s54
      %p60 = scmp.eq.s32.totalorder %s14, 0
      %p61 = por %p59, %p60
      %p62 = scmp.ne.s32.totalorder %s51, %s54
      %p63 = scmp.eq.s32.totalorder %s19, 1
      %p64 = por %p62, %p63
      %p65 = scmp.ne.s32.totalorder %s54, %s55
      %p66 = scmp.eq.s32.totalorder %s19, 0
      %p67 = por %p65, %p66
      %p68 = scmp.ne.s32.totalorder %s54, %s55
      %p69 = scmp.eq.s32.totalorder %s20, 1
      %p70 = por %p68, %p69
      %p72 = scmp.ne.s32.totalorder %s55, %s71
      %p73 = scmp.eq.s32.totalorder %s20, 0
      %p74 = por %p72, %p73
      %s75 = sadd.s32 %s22, %s23
      %p76 = scmp.lt.s32.totalorder %s75, 0
      %s77 = scalar_select %p76, %s75, 0
      %s78 = sadd.s32 %s36, %s32
      %p79 = scmp.lt.s32.totalorder %s78, 0
      %s80 = scalar_select %p79, %s78, 0
      %s81 = ssub.s32 %s21, %s40
      %s82 = ssub.s32 %s77, %s80
      %s83 = sor.u32 %s81, %s82
      %p84 = scmp.eq.s32.totalorder %s83, 0
      %s86 = sadd.s32 %s85, 1
      %s87 = scalar_select %p84, %s85, %s86
      %p90 = pneg %p84
      %p91 = scmp.eq.s32.totalorder %s14, 1
      %p92 = por %p90, %p91
      %p93 = scmp.ne.s32.totalorder %s85, %s88
      %p94 = scmp.eq.s32.totalorder %s14, 0
      %p95 = por %p93, %p94
      %p96 = scmp.ne.s32.totalorder %s85, %s88
      %p97 = scmp.eq.s32.totalorder %s19, 1
      %p98 = por %p96, %p97
      %p99 = scmp.ne.s32.totalorder %s88, %s89
      %p100 = scmp.eq.s32.totalorder %s19, 0
      %p101 = por %p99, %p100
      %p102 = scmp.ne.s32.totalorder %s88, %s89
      %p103 = scmp.eq.s32.totalorder %s20, 1
      %p104 = por %p102, %p103
      %p106 = scmp.ne.s32.totalorder %s89, %s105
      %p107 = scmp.eq.s32.totalorder %s20, 0
      %p108 = por %p106, %p107
      %s109 = ssub.s32 %s21, %s40
      %p110 = scmp.eq.s32.totalorder %s109, 0
      %s112 = sadd.s32 %s111, 1
      %s113 = scalar_select %p110, %s111, %s112
      %p116 = pneg %p110
      %p117 = scmp.eq.s32.totalorder %s14, 1
      %p118 = por %p116, %p117
      %p119 = scmp.ne.s32.totalorder %s111, %s114
      %p120 = scmp.eq.s32.totalorder %s14, 0
      %p121 = por %p119, %p120
      %p122 = scmp.ne.s32.totalorder %s111, %s114
      %p123 = scmp.eq.s32.totalorder %s19, 1
      %p124 = por %p122, %p123
      %p125 = scmp.ne.s32.totalorder %s114, %s115
      %p126 = scmp.eq.s32.totalorder %s19, 0
      %p127 = por %p125, %p126
      %p128 = scmp.ne.s32.totalorder %s114, %s115
      %p129 = scmp.eq.s32.totalorder %s20, 1
      %p130 = por %p128, %p129
      %p132 = scmp.ne.s32.totalorder %s115, %s131
      %p133 = scmp.eq.s32.totalorder %s20, 0
      %p134 = por %p132, %p133
      %s135 = ssub.s32 %s21, %s40
      %p136 = scmp.eq.s32.totalorder %s135, 0
      %s138 = sadd.s32 %s137, 1
      %s139 = scalar_select %p136, %s137, %s138
      %p142 = pneg %p136
      %p143 = scmp.eq.s32.totalorder %s14, 1
      %p144 = por %p142, %p143
      %p145 = scmp.ne.s32.totalorder %s137, %s140
      %p146 = scmp.eq.s32.totalorder %s14, 0
      %p147 = por %p145, %p146
      %p148 = scmp.ne.s32.totalorder %s137, %s140
      %p149 = scmp.eq.s32.totalorder %s19, 1
      %p150 = por %p148, %p149
      %p151 = scmp.ne.s32.totalorder %s140, %s141
      %p152 = scmp.eq.s32.totalorder %s19, 0
      %p153 = por %p151, %p152
      %p154 = scmp.ne.s32.totalorder %s140, %s141
      %p155 = scmp.eq.s32.totalorder %s20, 1
      %p156 = por %p154, %p155
      %p158 = scmp.ne.s32.totalorder %s141, %s157
      %p159 = scmp.eq.s32.totalorder %s20, 0
      %p160 = por %p158, %p159
      %s161 = ssub.s32 %s21, %s40
      %p162 = scmp.eq.s32.totalorder %s161, 0
      %s164 = sadd.s32 %s163, 1
      %s165 = scalar_select %p162, %s163, %s164
      %p168 = pneg %p162
      %p169 = scmp.eq.s32.totalorder %s14, 1
      %p170 = por %p168, %p169
      %p171 = scmp.ne.s32.totalorder %s163, %s166
      %p172 = scmp.eq.s32.totalorder %s14, 0
      %p173 = por %p171, %p172
      %p174 = scmp.ne.s32.totalorder %s163, %s166
      %p175 = scmp.eq.s32.totalorder %s19, 1
      %p176 = por %p174, %p175
      %p177 = scmp.ne.s32.totalorder %s166, %s167
      %p178 = scmp.eq.s32.totalorder %s19, 0
      %p179 = por %p177, %p178
      %p180 = scmp.ne.s32.totalorder %s166, %s167
      %p181 = scmp.eq.s32.totalorder %s20, 1
      %p182 = por %p180, %p181
      %p184 = scmp.ne.s32.totalorder %s167, %s183
      %p185 = scmp.eq.s32.totalorder %s20, 0
      %p186 = por %p184, %p185
      %s187 = ssub.s32 %s21, %s40
      %s188 = ssub.s32 %s22, %s36
      %s189 = sor.u32 %s187, %s188
      %p190 = scmp.eq.s32.totalorder %s189, 0
      %s192 = sadd.s32 %s191, 1
      %s193 = scalar_select %p190, %s191, %s192
      %p196 = pneg %p190
      %p197 = scmp.eq.s32.totalorder %s14, 1
      %p198 = por %p196, %p197
      %p199 = scmp.ne.s32.totalorder %s191, %s194
      %p200 = scmp.eq.s32.totalorder %s14, 0
      %p201 = por %p199, %p200
      %p202 = scmp.ne.s32.totalorder %s191, %s194
      %p203 = scmp.eq.s32.totalorder %s19, 1
      %p204 = por %p202, %p203
      %p205 = scmp.ne.s32.totalorder %s194, %s195
      %p206 = scmp.eq.s32.totalorder %s19, 0
      %p207 = por %p205, %p206
      %p208 = scmp.ne.s32.totalorder %s194, %s195
      %p209 = scmp.eq.s32.totalorder %s20, 1
      %p210 = por %p208, %p209
      %p212 = scmp.ne.s32.totalorder %s195, %s211
      %p213 = scmp.eq.s32.totalorder %s20, 0
      %p214 = por %p212, %p213
      %p215 = scmp.le.s32.totalorder 1, %s14
      %p216 = scmp.lt.s32.totalorder %s14, 3
      %p217 = pnand %p215, %p216
      %p218 = pneg %p217
      // Predicated region
      $region9: #{tpu_custom_call.1} parent=5 // pred_check
        _
      $region10: #{tpu_custom_call.1} parent=5 // pred_check_branch
        %220 = sbr.rel (%p217) target = $region12
      $region11: #{tpu_custom_call.1} parent=5 // pred_region
        %s221 = ssub.s32 %s14, 1
      $region12: #{tpu_custom_call.1} parent=5 // pred_fallthru
        _
      %p222 = scmp.lt.s32.totalorder %s14, 2
      // Predicated region
      $region13: #{tpu_custom_call.1} parent=5 // pred_check
        %p223 = pneg %p222
      $region14: #{tpu_custom_call.1} parent=5 // pred_check_branch
        %225 = sbr.rel (%p223) target = $region16
      $region15: #{tpu_custom_call.1} parent=5 // pred_region
        // Predicated region
        $region17: #{tpu_custom_call.1} parent=15 // pred_check
          %p226 = pneg %p61
        $region18: #{tpu_custom_call.1} parent=15 // pred_check_branch
          %228 = sbr.rel (%p226) target = $region20
        $region19: #{tpu_custom_call.1} parent=15 // pred_region
          %s229 = sadd.s32 %s22, %s23
          %p230 = scmp.lt.s32.totalorder %s229, 0
          %s231 = scalar_select %p230, %s229, 0
          %s232 = smul.u32 2, %s231
          %p233 = scmp.lt.s32.totalorder %s21, 1
          %s234 = scalar_select %p233, %s21, 1
          %p235 = scmp.lt.s32.totalorder %s232, 1
          %s236 = scalar_select %p235, %s232, 1
          %s237 = smul.addr %s234, 2
          %s238 = sadd.s32 %s236, %s237
          %s239 = smul.addr %s238, 4
          %s240 = scalar_lea.vmem %s0, %s239
          %s241 = sadd.s32 %s22, %s23
          %p242 = scmp.lt.s32.totalorder %s241, 0
          %s243 = scalar_select %p242, %s241, 0
          %s244 = smul.u32 2, %s243
        $region20: #{tpu_custom_call.1} parent=15 // pred_fallthru
          _
        // Predicated region
        $region21: #{tpu_custom_call.1} parent=15 // pred_check
          %p245 = pneg %p95
        $region22: #{tpu_custom_call.1} parent=15 // pred_check_branch
          %247 = sbr.rel (%p245) target = $region24
        $region23: #{tpu_custom_call.1} parent=15 // pred_region
          %s248 = sadd.s32 %s22, %s23
          %p249 = scmp.lt.s32.totalorder %s248, 0
          %s250 = scalar_select %p249, %s248, 0
          %s251 = smul.u32 2, %s250
          %p252 = scmp.lt.s32.totalorder %s21, 1
          %s253 = scalar_select %p252, %s21, 1
          %p254 = scmp.lt.s32.totalorder %s251, 1
          %s255 = scalar_select %p254, %s251, 1
          %s256 = smul.addr %s253, 2
          %s257 = sadd.s32 %s255, %s256
          %s258 = scalar_lea.vmem %s1, %s257
          %s259 = sadd.s32 %s22, %s23
          %p260 = scmp.lt.s32.totalorder %s259, 0
          %s261 = scalar_select %p260, %s259, 0
          %s262 = smul.u32 2, %s261
        $region24: #{tpu_custom_call.1} parent=15 // pred_fallthru
          _
        // Predicated region
        $region25: #{tpu_custom_call.1} parent=15 // pred_check
          %p263 = pneg %p121
        $region26: #{tpu_custom_call.1} parent=15 // pred_check_branch
          %265 = sbr.rel (%p263) target = $region28
        $region27: #{tpu_custom_call.1} parent=15 // pred_region
          %p266 = scmp.lt.s32.totalorder %s21, 1
          %s267 = scalar_select %p266, %s21, 1
          %s268 = smul.addr %s267, 8
          %s269 = scalar_lea.vmem %s2, %s268
        $region28: #{tpu_custom_call.1} parent=15 // pred_fallthru
          _
        // Predicated region
        $region29: #{tpu_custom_call.1} parent=15 // pred_check
          %p270 = pneg %p147
        $region30: #{tpu_custom_call.1} parent=15 // pred_check_branch
          %272 = sbr.rel (%p270) target = $region32
        $region31: #{tpu_custom_call.1} parent=15 // pred_region
          %p273 = scmp.lt.s32.totalorder %s21, 1
          %s274 = scalar_select %p273, %s21, 1
          %s275 = smul.addr %s274, 8
          %s276 = scalar_lea.vmem %s3, %s275
        $region32: #{tpu_custom_call.1} parent=15 // pred_fallthru
          _
        // Predicated region
        $region33: #{tpu_custom_call.1} parent=15 // pred_check
          %p277 = pneg %p173
        $region34: #{tpu_custom_call.1} parent=15 // pred_check_branch
          %279 = sbr.rel (%p277) target = $region36
        $region35: #{tpu_custom_call.1} parent=15 // pred_region
          %p280 = scmp.lt.s32.totalorder %s21, 1
          %s281 = scalar_select %p280, %s21, 1
          %s282 = smul.addr %s281, 8
          %s283 = scalar_lea.vmem %s4, %s282
        $region36: #{tpu_custom_call.1} parent=15 // pred_fallthru
          _
      $region16: #{tpu_custom_call.1} parent=5 // pred_fallthru
        _
      %p284 = scmp.le.s32.totalorder 1, %s14
      %p285 = scmp.lt.s32.totalorder %s14, 3
      %p286 = pnand %p284, %p285
      %p287 = pneg %p286
      // Predicated region
      $region37: #{tpu_custom_call.1} parent=5 // pred_check
        _
      $region38: #{tpu_custom_call.1} parent=5 // pred_check_branch
        %289 = sbr.rel (%p286) target = $region40
      $region39: #{tpu_custom_call.1} parent=5 // pred_region
        %s290 = ssub.s32 %s14, 1
        %s291 = sadd.s32 %s25, %s26
        %p292 = scmp.lt.s32.totalorder %s291, 0
        %s293 = scalar_select %p292, %s291, 0
        %s294 = smul.u32 2, %s293
        %p295 = scmp.lt.s32.totalorder %s24, 1
        %s296 = scalar_select %p295, %s24, 1
        %p297 = scmp.lt.s32.totalorder %s294, 1
        %s298 = scalar_select %p297, %s294, 1
        %s299 = smul.addr %s296, 2
        %s300 = sadd.s32 %s298, %s299
        %s301 = smul.addr %s300, 4
        %s302 = scalar_lea.vmem %s0, %s301
        %p303 = pneg %p67
        %p304 = pneg %p64
        %s305 = sadd.s32 %s25, %s26
        %p306 = scmp.lt.s32.totalorder %s305, 0
        %s307 = scalar_select %p306, %s305, 0
        %s308 = smul.u32 2, %s307
        %p309 = scmp.lt.s32.totalorder %s24, 1
        %s310 = scalar_select %p309, %s24, 1
        %p311 = scmp.lt.s32.totalorder %s308, 1
        %s312 = scalar_select %p311, %s308, 1
        %s313 = smul.addr %s310, 2
        %s314 = sadd.s32 %s312, %s313
        %s315 = scalar_lea.vmem %s1, %s314
        %p316 = pneg %p101
        %p317 = pneg %p98
        %p318 = scmp.lt.s32.totalorder %s24, 1
        %s319 = scalar_select %p318, %s24, 1
        %s320 = smul.addr %s319, 8
        %s321 = scalar_lea.vmem %s2, %s320
        %p322 = pneg %p127
        %p323 = pneg %p124
        %p324 = scmp.lt.s32.totalorder %s24, 1
        %s325 = scalar_select %p324, %s24, 1
        %s326 = smul.addr %s325, 8
        %s327 = scalar_lea.vmem %s3, %s326
        %p328 = pneg %p153
        %p329 = pneg %p150
        %p330 = scmp.lt.s32.totalorder %s24, 1
        %s331 = scalar_select %p330, %s24, 1
        %s332 = smul.addr %s331, 8
        %s333 = scalar_lea.vmem %s4, %s332
        %p334 = pneg %p179
        %p335 = pneg %p176
        %p336 = pneg %p207
        %p337 = pneg %p204
        %s338 = sand.u32 %s194, 1
        %s339 = scalar_lea.sflag [#allocation3], %s338
        %s340 = sand.u32 %s194, 1
        %s341 = smul.addr %s340, 16
        %s342 = scalar_lea.vmem [#allocation2], %s341
        %s343 = sadd.s32 %s25, %s26
        %p344 = scmp.lt.s32.totalorder %s343, 0
        %s345 = scalar_select %p344, %s343, 0
        %s346 = smul.u32 2, %s345
        %p347 = scmp.lt.s32.totalorder %s24, 1
        %s348 = scalar_select %p347, %s24, 1
        %p349 = scmp.lt.s32.totalorder %s346, 1
        %s350 = scalar_select %p349, %s346, 1
        %s351 = smul.addr %s348, 2
        %s352 = sadd.s32 %s350, %s351
        %s353 = smul.addr %s352, 4
        %s354 = scalar_lea.vmem %s0, %s353
        %s355 = sadd.s32 %s25, %s26
        %p356 = scmp.lt.s32.totalorder %s355, 0
        %s357 = scalar_select %p356, %s355, 0
        %s358 = smul.u32 2, %s357
        %s359 = sadd.s32 %s25, %s26
        %p360 = scmp.lt.s32.totalorder %s359, 0
        %s361 = scalar_select %p360, %s359, 0
        %s362 = smul.u32 2, %s361
        %p363 = scmp.lt.s32.totalorder %s24, 1
        %s364 = scalar_select %p363, %s24, 1
        %p365 = scmp.lt.s32.totalorder %s362, 1
        %s366 = scalar_select %p365, %s362, 1
        %s367 = smul.addr %s364, 2
        %s368 = sadd.s32 %s366, %s367
        %s369 = scalar_lea.vmem %s1, %s368
        %s370 = sadd.s32 %s25, %s26
        %p371 = scmp.lt.s32.totalorder %s370, 0
        %s372 = scalar_select %p371, %s370, 0
        %s373 = smul.u32 2, %s372
        %p374 = scmp.lt.s32.totalorder %s24, 1
        %s375 = scalar_select %p374, %s24, 1
        %s376 = smul.addr %s375, 8
        %s377 = scalar_lea.vmem %s2, %s376
        %p378 = scmp.lt.s32.totalorder %s24, 1
        %s379 = scalar_select %p378, %s24, 1
        %s380 = smul.addr %s379, 8
        %s381 = scalar_lea.vmem %s3, %s380
        %p382 = scmp.lt.s32.totalorder %s24, 1
        %s383 = scalar_select %p382, %s24, 1
        %s384 = smul.addr %s383, 8
        %s385 = scalar_lea.vmem %s4, %s384
        %p386 = scmp.eq.s32.totalorder %s26, 0
        // Predicated region
        $region41: #{tpu_custom_call.1} parent=39 // pred_check
          %p387 = pneg %p386
        $region42: #{tpu_custom_call.1} parent=39 // pred_check_branch
          %389 = sbr.rel (%p387) target = $region44
        $region43: #{tpu_custom_call.1} parent=39 // pred_region
          %390 = vst [vmem:[%s342] sm:$0xff] 0.0
          %391 = vst [vmem:[%s342 + $0x8] sm:$0xff] 0.0
        $region44: #{tpu_custom_call.1} parent=39 // pred_fallthru
          _
        %v392 = vld [vmem:[%s354] sm:$0xff]
        %v393 = vld [vmem:[%s369] sm:$0x3]
        %v394 = vunpack.c.l.b16 %v393
        %v395 = vld [vmem:[%s377] sm:$0xff]
        %v396 = vld [vmem:[%s381] sm:$0xff]
        %v397 = vld [vmem:[%s385] sm:$0xff]
        %s398 = sadd.s32 %s25, %s26
        %s399 = smul.u32 %s398, 256
        %v400 = vlaneseq
        %v401 = vand.u32 %v400, 127
        %v402 = vadd.s32 %v401, 128
        %v403 = vstv %s399
        %v404 = vadd.s32 %v403, %v401
        %v405 = vadd.s32 %v403, %v402
        %vm406 = vcmp.lt.s32.totalorder %v404, 256
        %vm407 = vcmp.lt.s32.totalorder %v405, 256
        %v409 = vcombine.high %v392, %v392
        %vm410 = vcmask 31744
        %v412 = vsel %vm410, %v395, 0
        %vm414 = vcmask 1043456
        %v415 = vsel %vm414, %v392, 0
        %v417 = vsel %vm414, %v409, 0
        %419 = vmatprep.subr.mxu0 0.0
        %420 = vmatpush1.msra.mxu0 0.0
        %421 = vmatprep.subr.mxu0 0.0
        %422 = vmatpush1.msra.mxu0 0.0
        %423 = vmatprep.subr.mxu0 0.0
        %424 = vmatpush1.msra.mxu0 0.0
        %425 = vmatprep.subr.mxu0 0.0
        %426 = vmatpush1.msra.mxu0 0.0
        %427 = vmatprep.subr.mxu0 0.0
        %428 = vmatpush1.msra.mxu0 0.0
        %429 = vmatprep.subr.mxu0 0.0
        %430 = vmatpush1.msra.mxu0 0.0
        %431 = vmatprep.subr.mxu0 0.0
        %432 = vmatpush1.msra.mxu0 0.0
        %433 = vmatprep.subr.mxu0 0.0
        %434 = vmatpush1.msra.mxu0 0.0
        %435 = vmatprep.subr.mxu0 0.0
        %436 = vmatpush1.msra.mxu0 0.0
        %437 = vmatprep.subr.mxu0 0.0
        %438 = vmatpush1.msra.mxu0 0.0
        %439 = vmatprep.subr.mxu0 0.0
        %440 = vmatpush1.msra.mxu0 0.0
        %441 = vmatprep.subr.mxu0 0.0
        %442 = vmatpush1.msra.mxu0 0.0
        %443 = vmatprep.subr.mxu0 0.0
        %444 = vmatpush1.msra.mxu0 0.0
        %445 = vmatprep.subr.mxu0 0.0
        %446 = vmatpush1.msra.mxu0 0.0
        %447 = vmatprep.subr.mxu0 0.0
        %448 = vmatpush1.msra.mxu0 0.0
        %449 = vmatprep.subr.mxu0 %v417
        %450 = vmatpush1.msra.mxu0 %v415
        %451 = vmatprep.subr.mxu0 0.0
        %452 = vmatpush2.msra.mxu0 0.0
        %453 = vmatprep.subr.mxu0 0.0
        %454 = vmatpush2.msra.mxu0 0.0
        %455 = vmatprep.subr.mxu0 0.0
        %456 = vmatpush2.msra.mxu0 0.0
        %457 = vmatprep.subr.mxu0 0.0
        %458 = vmatpush2.msra.mxu0 0.0
        %459 = vmatprep.subr.mxu0 0.0
        %460 = vmatpush2.msra.mxu0 0.0
        %461 = vmatprep.subr.mxu0 0.0
        %462 = vmatpush2.msra.mxu0 0.0
        %463 = vmatprep.subr.mxu0 0.0
        %464 = vmatpush2.msra.mxu0 0.0
        %465 = vmatprep.subr.mxu0 0.0
        %466 = vmatpush2.msra.mxu0 0.0
        %467 = vmatprep.subr.mxu0 0.0
        %468 = vmatpush2.msra.mxu0 0.0
        %469 = vmatprep.subr.mxu0 0.0
        %470 = vmatpush2.msra.mxu0 0.0
        %471 = vmatprep.subr.mxu0 0.0
        %472 = vmatpush2.msra.mxu0 0.0
        %473 = vmatprep.subr.mxu0 0.0
        %474 = vmatpush2.msra.mxu0 0.0
        %475 = vmatprep.subr.mxu0 0.0
        %476 = vmatpush2.msra.mxu0 0.0
        %477 = vmatprep.subr.mxu0 0.0
        %478 = vmatpush2.msra.mxu0 0.0
        %479 = vmatprep.subr.mxu0 0.0
        %480 = vmatpush2.msra.mxu0 0.0
        %481 = vmatprep.subr.mxu0 0.0
        %482 = vmatpush2.msra.mxu0 0.0
        %483 = vmatprep.mubr.f32.mxu0 0.0
        %484 = vmatmul.mubr.f32.gmra.mxu0 %v412
        %v485 = vpop.f32.mrf.mxu0
        %v486 = vadd.f32 0.0, %v485
        %v487 = vpop.f32.mrf.mxu0
        %v488 = vadd.f32 0.0, %v487
        %489 = vdwg.mxu0
        %v490 = vmul.f32 %v392, %v392
        %v492 = vcombine.high %v490, %v490
        %v494 = vsel %vm414, %v490, 0.0
        %v495 = vrot.slane %v494, 4
        %v496 = vadd.f32 %v494, %v495
        %v497 = vrot.slane %v496, 2
        %v498 = vadd.f32 %v496, %v497
        %v499 = vrot.slane %v498, 1
        %v500 = vadd.f32 %v498, %v499
        %v501 = vsel %vm414, %v492, 0.0
        %v502 = vrot.slane %v501, 4
        %v503 = vadd.f32 %v501, %v502
        %v504 = vrot.slane %v503, 2
        %v505 = vadd.f32 %v503, %v504
        %v506 = vrot.slane %v505, 1
        %v507 = vadd.f32 %v505, %v506
        %v508 = vmul.f32 %v486, 2.0
        %v509 = vmul.f32 %v488, 2.0
        %511 = vset.pattern.permute.xlu0 0
        %512 = vperm.xlu0 %511, %v397
        %v513 = vpop.permute.xlu0 %512
        %v515 = vsub.f32 %v513, %v508
        %v516 = vsub.f32 %v513, %v509
        %v517 = vadd.f32 %v515, %v500
        %v518 = vadd.f32 %v516, %v507
        %v519 = vmax.f32 %v517, 0.0
        %v520 = vmax.f32 %v518, 0.0
        %v521 = vrsqrt.pop %v519
        %v522 = vmul.f32 %v519, %v521
        %vm523 = vcmp.eq.f32.partialorder %v519, inf
        %v524 = vsel %vm523, %v519, %v522
        %vm525 = vcmp.eq.f32.partialorder %v519, 0.0
        %v526 = vand.u32 %v519, 2147483648
        %v527 = vsel %vm525, %v526, %v524
        %v528 = vrsqrt.pop %v520
        %v529 = vmul.f32 %v520, %v528
        %vm530 = vcmp.eq.f32.partialorder %v520, inf
        %v531 = vsel %vm530, %v520, %v529
        %vm532 = vcmp.eq.f32.partialorder %v520, 0.0
        %v533 = vand.u32 %v520, 2147483648
        %v534 = vsel %vm532, %v533, %v531
        %v535 = vsub.f32 %v527, 0.1
        %v536 = vsub.f32 %v534, 0.1
        %v537 = vmax.f32 %v535, 0.0
        %v538 = vmax.f32 %v536, 0.0
        %v539 = vlaneseq
        %v540 = vshrl.u32 %v539, 7
        %v541 = vsub.s32 0, %v540
        %v542 = vrot.slane %v394, %v541
        %v543 = vlaneseq
        %v544 = vshrl.u32 %v543, 7
        %v545 = vsub.s32 2, %v544
        %v546 = vrot.slane %v394, %v545
        %v547 = vlaneseq
        %v548 = vshrl.u32 %v547, 7
        %v549 = vsub.s32 0, %v548
        %v550 = vrot.slane %v542, %v549
        %v551 = vlaneseq
        %v552 = vshrl.u32 %v551, 7
        %v553 = vsub.s32 0, %v552
        %v554 = vrot.slane %v546, %v553
        %555 = vset.pattern.permute.xlu0 0
        %556 = vperm.xlu0 %555, %v396
        %v557 = vpop.permute.xlu0 %556
        %vm558 = vcmp.eq.s32.totalorder %v550, %v557
        %vm559 = vcmp.eq.s32.totalorder %v554, %v557
        %v560 = vsel %vm406, 1, 0
        %v561 = vsel %vm407, 1, 0
        %vm562 = vcmp.eq.s32.totalorder %v560, 1
        %vm563 = vcmp.eq.s32.totalorder %v561, 1
        %vm564 = vmand %vm558, %vm562
        %vm565 = vmand %vm559, %vm563
        %v566 = vsel %vm564, %v537, 0.0
        %v567 = vsel %vm565, %v538, 0.0
        %v568 = vadd.f32 %v566, %v567
        %569 = vadd.xlane.f32.xlu0 %v568
        %v570 = vpop.xlane.xlu0 %569
        %v571 = vsel %vm564, 1, 0
        %v572 = vsel %vm565, 1, 0
        %v573 = vcvt.s32.f32 %v571
        %v574 = vcvt.s32.f32 %v572
        %v575 = vadd.f32 %v573, %v574
        %576 = vadd.xlane.f32.xlu0 %v575
        %v577 = vpop.xlane.xlu0 %576
        %v578 = vld [vmem:[%s342] sm:$0xff]
        %v579 = vadd.f32 %v578, %v570
        %580 = vst [vmem:[%s342] sm:$0xff] %v579
        %s581 = scalar_lea.vmem %s342, 8 [#allocation2]
        %v582 = vld [vmem:[%s581] sm:$0xff]
        %v583 = vadd.f32 %v582, %v577
        %584 = vst [vmem:[%s581] sm:$0xff] %v583
        %s585 = sand.u32 %s194, 1
        %s586 = scalar_lea.sflag [#allocation3], %s585
        %s587 = sand.u32 %s194, 1
        %s588 = smul.addr %s587, 16
        %s589 = scalar_lea.vmem [#allocation2], %s588
        // Predicated region
        $region45: #{tpu_custom_call.1} parent=39 // pred_check
          %p590 = pneg %p204
        $region46: #{tpu_custom_call.1} parent=39 // pred_check_branch
          %592 = sbr.rel (%p590) target = $region48
        $region47: #{tpu_custom_call.1} parent=39 // pred_region
          %s594 = ssub.s32 256, 256
          %595 = vsyncadd %s586, %s594
          %s596 = smul.addr %s25, 2
          %s597 = smul.addr %s24, 2
          %s598 = sadd.s32 %s596, %s597
          %s599 = smul.addr %s598, 128
          %s600 = scalar_lea.hbm %s5, %s599
          %s601 = sshll.u32 %s589, 4
          %s602 = int_to_ptr.vmem [resolvable:$true] %s601
          %607 = dma.vmem_to_hbm [thread:$0]  %s602, 256, %s600, %s586, 128, 128, 8
        $region48: #{tpu_custom_call.1} parent=39 // pred_fallthru
          _
      $region40: #{tpu_custom_call.1} parent=5 // pred_fallthru
        _
      %p608 = scmp.le.s32.totalorder 2, %s14
      // Predicated region
      $region49: #{tpu_custom_call.1} parent=5 // pred_check
        %p609 = pneg %p608
      $region50: #{tpu_custom_call.1} parent=5 // pred_check_branch
        %611 = sbr.rel (%p609) target = $region52
      $region51: #{tpu_custom_call.1} parent=5 // pred_region
        %s612 = ssub.s32 %s14, 2
        // Predicated region
        $region53: #{tpu_custom_call.1} parent=51 // pred_check
          %p613 = pneg %p210
        $region54: #{tpu_custom_call.1} parent=51 // pred_check_branch
          %615 = sbr.rel (%p613) target = $region56
        $region55: #{tpu_custom_call.1} parent=51 // pred_region
          %s616 = sand.u32 %s195, 1
          %s617 = scalar_lea.sflag [#allocation3], %s616
          %s618 = sand.u32 %s195, 1
          %s619 = smul.addr %s618, 16
          %s620 = scalar_lea.vmem [#allocation2], %s619
          %621 = dma.done %s617, 256
        $region56: #{tpu_custom_call.1} parent=51 // pred_fallthru
          _
      $region52: #{tpu_custom_call.1} parent=5 // pred_fallthru
        _
    $region6: #{tpu_custom_call.1} parent=1 // loop_footer
      %s18 = sadd.s32 1, %s14
    $region7: #{tpu_custom_call.1} parent=1 // loop_footer_branch
      %13 = sbr.rel target = $region3
    $region8: #{tpu_custom_call.1} parent=1 // loop_exit
      _
    %622 = vsyncpa [#allocation3], 1
    %s623 = scalar_lea.sflag [#allocation3], 1
    %624 = vsyncpa %s623, 1

</llo_original>
